<compile_context>
chip_gen: v7x
topology: tpu7x:2x2x1
jax: 0.10.0
libtpu: 0.0.40
codegen_flags: <defaults>
</compile_context>

<pallas_src>
import jax
import jax.numpy as jnp
from jax.experimental import pallas as pl
from jax.experimental.pallas import tpu as pltpu


def _mlp_kernel(x_ref, w1_ref, b1_ref, w2_ref, b2_ref, o_ref):
    x = x_ref[...]                                    # (TILE, 3)   f32
    w1 = w1_ref[...]                                  # (3, 150)    f32

    # Layer 1 on the VPU: K=3 -> three broadcast FMAs + bias, then ReLU.
    h = (x[:, 0:1] * w1[0:1, :]
         + x[:, 1:2] * w1[1:2, :]
         + x[:, 2:3] * w1[2:3, :]
         + b1_ref[...])                               # (TILE, 150)
    h = jnp.maximum(h, 0.0)

    # Layer 2 on the MXU, full f32 with f32 accumulation (compute is hidden
    # behind the x / out DMAs, so no need to trade precision for speed).
    y = jnp.dot(h, w2_ref[...], preferred_element_type=jnp.float32)  # (TILE, 5)
    o_ref[...] = (y + b2_ref[...]).astype(o_ref.dtype)


def _round_up(n, m):
    return ((n + m - 1) // m) * m


def _cdiv(a, b):
    return -(-a // b)


@jax.jit
def simple_net_forward(x, w1, b1, w2, b2):
    """x: (N, 3) f32; w1: (3, 150); b1: (1, 150); w2: (150, 5); b2: (1, 5)."""
    n, in_f = x.shape
    hid = w1.shape[1]
    out_f = w2.shape[1]

    # Adaptive batch tile: as large as possible (fewer grid steps, ~0.35 us
    # per-step overhead) but capped at 2048 for VMEM headroom, and sized so the
    # zero-padded tail is < 8 rows per tile on ragged batch sizes.
    max_tile = 2048
    num_tiles = max(1, _cdiv(n, max_tile))
    tile = _round_up(_cdiv(n, num_tiles), 8)          # multiple of 8, <= 2048
    padded_n = num_tiles * tile
    if padded_n != n:
        x = jnp.pad(x, ((0, padded_n - n), (0, 0)))

    out = pl.pallas_call(
        _mlp_kernel,
        out_shape=jax.ShapeDtypeStruct((padded_n, out_f), jnp.float32),
        grid=(num_tiles,),
        in_specs=[
            pl.BlockSpec((tile, in_f), lambda i: (i, 0)),   # x: tiled over batch
            pl.BlockSpec((in_f, hid), lambda i: (0, 0)),    # w1: resident
            pl.BlockSpec((1, hid), lambda i: (0, 0)),       # b1: resident
            pl.BlockSpec((hid, out_f), lambda i: (0, 0)),   # w2: resident
            pl.BlockSpec((1, out_f), lambda i: (0, 0)),     # b2: resident
        ],
        out_specs=pl.BlockSpec((tile, out_f), lambda i: (i, 0)),
        compiler_params=pltpu.CompilerParams(
            dimension_semantics=("parallel",)),
    )(x, w1, b1, w2, b2)

    return out[:n]


def init_params(key):
    """Mirror nn.Linear's default U(-1/sqrt(fan_in), 1/sqrt(fan_in)) init.

    Weights stored as (in_features, out_features) == transpose of PyTorch's (out, in).
    """
    k1, k2, k3, k4 = jax.random.split(key, 4)
    bound1 = 1.0 / jnp.sqrt(3.0)
    bound2 = 1.0 / jnp.sqrt(150.0)
    w1 = jax.random.uniform(k1, (3, 150), jnp.float32, -bound1, bound1)
    b1 = jax.random.uniform(k2, (1, 150), jnp.float32, -bound1, bound1)
    w2 = jax.random.uniform(k3, (150, 5), jnp.float32, -bound2, bound2)
    b2 = jax.random.uniform(k4, (1, 5), jnp.float32, -bound2, bound2)
    return w1, b1, w2, b2


def _reference(x, w1, b1, w2, b2):
    hp = jax.lax.Precision.HIGHEST
    h = jnp.maximum(jnp.dot(x, w1, precision=hp) + b1, 0.0)
    return jnp.dot(h, w2, precision=hp) + b2


if __name__ == "__main__":
    key = jax.random.PRNGKey(0)
    kx, kx2, kp = jax.random.split(key, 3)
    w1, b1, w2, b2 = init_params(kp)

    # Small batch matching the module's Linear(3, ...) input.
    x_small = jax.random.normal(kx, (8, 3), dtype=jnp.float32)
    out_small = jax.block_until_ready(simple_net_forward(x_small, w1, b1, w2, b2))
    assert out_small.shape == (8, 5)
    ref_small = _reference(x_small, w1, b1, w2, b2)
    # Full f32 kernel -> tight tolerance (MXU f32 multi-pass rounding only).
    assert jnp.allclose(out_small, ref_small, atol=2e-3, rtol=2e-3), (
        float(jnp.max(jnp.abs(out_small - ref_small))))

    # Ragged batch exercising the multi-step grid + adaptive-tile padding path.
    x_big = jax.random.normal(kx2, (2500, 3), dtype=jnp.float32)
    out_big = jax.block_until_ready(simple_net_forward(x_big, w1, b1, w2, b2))
    assert out_big.shape == (2500, 5)
    ref_big = _reference(x_big, w1, b1, w2, b2)
    assert jnp.allclose(out_big, ref_big, atol=2e-3, rtol=2e-3), (
        float(jnp.max(jnp.abs(out_big - ref_big))))

    print("KERNEL_OK")
</pallas_src>

<mosaic_0001>
module attributes {stable_mosaic.version = 11 : i64} {
  func.func @_mlp_kernel(%arg0: i32, %arg1: memref<8x3xf32, #tpu.memory_space<vmem>>, %arg2: memref<3x150xf32, #tpu.memory_space<vmem>>, %arg3: memref<1x150xf32, #tpu.memory_space<vmem>>, %arg4: memref<150x5xf32, #tpu.memory_space<vmem>>, %arg5: memref<1x5xf32, #tpu.memory_space<vmem>>, %arg6: memref<8x5xf32, #tpu.memory_space<vmem>>) attributes {dimension_semantics = [#tpu.dimension_semantics<parallel>], iteration_bounds = array<i64: 1>, scalar_prefetch = 0 : i64, scratch_operands = 0 : i64, tpu.core_type = #tpu.core_type<tc>, window_params = [{transform_indices = @transform_0, window_bounds = array<i64: 8, 3>}, {pipeline_mode = #tpu.pipeline_mode<synchronous>, transform_indices = @transform_1, window_bounds = array<i64: 3, 150>}, {pipeline_mode = #tpu.pipeline_mode<synchronous>, transform_indices = @transform_2, window_bounds = array<i64: 1, 150>}, {pipeline_mode = #tpu.pipeline_mode<synchronous>, transform_indices = @transform_3, window_bounds = array<i64: 150, 5>}, {pipeline_mode = #tpu.pipeline_mode<synchronous>, transform_indices = @transform_4, window_bounds = array<i64: 1, 5>}, {transform_indices = @transform_5, window_bounds = array<i64: 8, 5>}]} {
    %c0 = arith.constant 0 : index
    %c0_0 = arith.constant 0 : index
    %0 = vector.load %arg1[%c0, %c0_0] : memref<8x3xf32, #tpu.memory_space<vmem>>, vector<8x3xf32>
    %c0_1 = arith.constant 0 : index
    %c0_2 = arith.constant 0 : index
    %1 = vector.load %arg2[%c0_1, %c0_2] : memref<3x150xf32, #tpu.memory_space<vmem>>, vector<3x150xf32>
    %2 = vector.extract_strided_slice %0 {offsets = [0, 0], sizes = [8, 1], strides = [1, 1]} : vector<8x3xf32> to vector<8x1xf32>
    %3 = vector.extract_strided_slice %1 {offsets = [0, 0], sizes = [1, 150], strides = [1, 1]} : vector<3x150xf32> to vector<1x150xf32>
    %4 = vector.broadcast %2 : vector<8x1xf32> to vector<8x150xf32>
    %5 = vector.broadcast %3 : vector<1x150xf32> to vector<8x150xf32>
    %6 = arith.mulf %4, %5 : vector<8x150xf32>
    %7 = vector.extract_strided_slice %0 {offsets = [0, 1], sizes = [8, 1], strides = [1, 1]} : vector<8x3xf32> to vector<8x1xf32>
    %8 = vector.extract_strided_slice %1 {offsets = [1, 0], sizes = [1, 150], strides = [1, 1]} : vector<3x150xf32> to vector<1x150xf32>
    %9 = vector.broadcast %7 : vector<8x1xf32> to vector<8x150xf32>
    %10 = vector.broadcast %8 : vector<1x150xf32> to vector<8x150xf32>
    %11 = arith.mulf %9, %10 : vector<8x150xf32>
    %12 = arith.addf %6, %11 : vector<8x150xf32>
    %13 = vector.extract_strided_slice %0 {offsets = [0, 2], sizes = [8, 1], strides = [1, 1]} : vector<8x3xf32> to vector<8x1xf32>
    %14 = vector.extract_strided_slice %1 {offsets = [2, 0], sizes = [1, 150], strides = [1, 1]} : vector<3x150xf32> to vector<1x150xf32>
    %15 = vector.broadcast %13 : vector<8x1xf32> to vector<8x150xf32>
    %16 = vector.broadcast %14 : vector<1x150xf32> to vector<8x150xf32>
    %17 = arith.mulf %15, %16 : vector<8x150xf32>
    %18 = arith.addf %12, %17 : vector<8x150xf32>
    %c0_3 = arith.constant 0 : index
    %c0_4 = arith.constant 0 : index
    %19 = vector.load %arg3[%c0_3, %c0_4] : memref<1x150xf32, #tpu.memory_space<vmem>>, vector<1x150xf32>
    %20 = vector.broadcast %19 : vector<1x150xf32> to vector<8x150xf32>
    %21 = arith.addf %18, %20 : vector<8x150xf32>
    %cst = arith.constant 0.000000e+00 : f32
    %22 = vector.broadcast %cst : f32 to vector<8x150xf32>
    %23 = arith.maximumf %21, %22 : vector<8x150xf32>
    %c0_5 = arith.constant 0 : index
    %c0_6 = arith.constant 0 : index
    %24 = vector.load %arg4[%c0_5, %c0_6] : memref<150x5xf32, #tpu.memory_space<vmem>>, vector<150x5xf32>
    %cst_7 = arith.constant dense<0.000000e+00> : vector<8x5xf32>
    %25 = tpu.matmul %23, %24, %cst_7 {dimension_numbers = #tpu.dot_dimension_numbers<[1], [0], [0], [1], [0, 0, 1, 1], [], []>} : vector<8x150xf32>, vector<150x5xf32>, vector<8x5xf32> -> vector<8x5xf32>
    %c0_8 = arith.constant 0 : index
    %c0_9 = arith.constant 0 : index
    %26 = vector.load %arg5[%c0_8, %c0_9] : memref<1x5xf32, #tpu.memory_space<vmem>>, vector<1x5xf32>
    %27 = vector.broadcast %26 : vector<1x5xf32> to vector<8x5xf32>
    %28 = arith.addf %25, %27 : vector<8x5xf32>
    %c0_10 = arith.constant 0 : index
    %c0_11 = arith.constant 0 : index
    %29 = vector.load %arg6[%c0_10, %c0_11] : memref<8x5xf32, #tpu.memory_space<vmem>>, vector<8x5xf32>
    tpu.vector_store %arg6[%c0_10, %c0_11], %28 {strides = array<i32>} : memref<8x5xf32, #tpu.memory_space<vmem>>, vector<8x5xf32>,
    return
  }
  func.func @transform_0(%arg0: i32) -> (i32, i32) {
    %c0_i32 = arith.constant 0 : i32
    %c0_i32_0 = arith.constant 0 : i32
    return %arg0, %c0_i32 : i32, i32
  }
  func.func @transform_1(%arg0: i32) -> (i32, i32) {
    %c0_i32 = arith.constant 0 : i32
    %c0_i32_0 = arith.constant 0 : i32
    %c0_i32_1 = arith.constant 0 : i32
    return %c0_i32, %c0_i32_0 : i32, i32
  }
  func.func @transform_2(%arg0: i32) -> (i32, i32) {
    %c0_i32 = arith.constant 0 : i32
    %c0_i32_0 = arith.constant 0 : i32
    %c0_i32_1 = arith.constant 0 : i32
    return %c0_i32, %c0_i32_0 : i32, i32
  }
  func.func @transform_3(%arg0: i32) -> (i32, i32) {
    %c0_i32 = arith.constant 0 : i32
    %c0_i32_0 = arith.constant 0 : i32
    %c0_i32_1 = arith.constant 0 : i32
    return %c0_i32, %c0_i32_0 : i32, i32
  }
  func.func @transform_4(%arg0: i32) -> (i32, i32) {
    %c0_i32 = arith.constant 0 : i32
    %c0_i32_0 = arith.constant 0 : i32
    %c0_i32_1 = arith.constant 0 : i32
    return %c0_i32, %c0_i32_0 : i32, i32
  }
  func.func @transform_5(%arg0: i32) -> (i32, i32) {
    %c0_i32 = arith.constant 0 : i32
    %c0_i32_0 = arith.constant 0 : i32
    return %arg0, %c0_i32 : i32, i32
  }
}

</mosaic_0001>

<llo_original>
// kernel: simple_net_forward.1
$region0: #{simple_net_forward.1}
  #allocation0 [shape = 'u32[]', space=smem, size = 0x4, offset = 0x4, fixed_abs, tag = 'smem constant byte address 0x4 - core index']
  #allocation1 [shape = 'u32[144,128]{1,0:T(1,128)}', space=vmem, size = 0x12000, scoped, tag = 'internal scratch']
  %s0 = inlined_call_operand.vmem [shape: f32[8,3], index: 0, kind: input, shape index: {}]
  %s1 = inlined_call_operand.vmem [shape: f32[3,150], index: 1, kind: input, shape index: {}]
  %s2 = inlined_call_operand.vmem [shape: f32[1,150], index: 2, kind: input, shape index: {}]
  %s3 = inlined_call_operand.vmem [shape: f32[150,5], index: 3, kind: input, shape index: {}]
  %s4 = inlined_call_operand.vmem [shape: f32[1,5], index: 4, kind: input, shape index: {}]
  %s5 = inlined_call_operand.hbm [shape: f32[8,5], index: 5, kind: output, shape index: {}]
  %s6 = sld [smem:[#allocation0]]
  $region30: #{simple_net_forward.1} parent=0
    _
  %s8 = ssub.s32 1, %s6
  %s9 = scalar_select 0, %s8, %s6
  $region1: #{simple_net_forward.1} parent=0
    #allocation2 [shape = 'u8[4096]{0}', space=vmem, size = 0x1000, scoped, tag = 'output window, operand 0, single buffered']
    #allocation3 [shape = 's32[1]{0}', space=sflag, size = 0x4, scoped, tag = 'scoped memory for simple_net_forward.1']
    %10 = vsyncpa [#allocation3], 0
    // Predicated region
    $region2: #{simple_net_forward.1} parent=1 // pred_check
      _
    $region3: #{simple_net_forward.1} parent=1 // pred_check_branch
      %12 = sbr.rel (0) target = $region5
    $region4: #{simple_net_forward.1} parent=1 // pred_region
      _
    $region5: #{simple_net_forward.1} parent=1 // pred_fallthru
      _
    // Predicated region
    $region6: #{simple_net_forward.1} parent=1 // pred_check
      _
    $region7: #{simple_net_forward.1} parent=1 // pred_check_branch
      %14 = sbr.rel (0) target = $region9
    $region8: #{simple_net_forward.1} parent=1 // pred_region
      _
    $region9: #{simple_net_forward.1} parent=1 // pred_fallthru
      _
    // Predicated region
    $region10: #{simple_net_forward.1} parent=1 // pred_check
      _
    $region11: #{simple_net_forward.1} parent=1 // pred_check_branch
      %16 = sbr.rel (0) target = $region13
    $region12: #{simple_net_forward.1} parent=1 // pred_region
      _
    $region13: #{simple_net_forward.1} parent=1 // pred_fallthru
      _
    // Predicated region
    $region14: #{simple_net_forward.1} parent=1 // pred_check
      _
    $region15: #{simple_net_forward.1} parent=1 // pred_check_branch
      %18 = sbr.rel (0) target = $region17
    $region16: #{simple_net_forward.1} parent=1 // pred_region
      _
    $region17: #{simple_net_forward.1} parent=1 // pred_fallthru
      _
    // Predicated region
    $region18: #{simple_net_forward.1} parent=1 // pred_check
      _
    $region19: #{simple_net_forward.1} parent=1 // pred_check_branch
      %20 = sbr.rel (0) target = $region21
    $region20: #{simple_net_forward.1} parent=1 // pred_region
      _
    $region21: #{simple_net_forward.1} parent=1 // pred_fallthru
      _
    %v21 = vld [vmem:[%s0] sm:$0xff]
    %v22 = vld [vmem:[%s1] sm:$0x77]
    %24 = vset.pattern.permute.xlu0 0
    %25 = vperm.xlu0 %24, %v21
    %v26 = vpop.permute.xlu0 %25
    %v29 = vlaneseq
    %v30 = vshrl.u32 %v29, 7
    %v31 = vsub.s32 0, %v30
    %v32 = vrot.slane %v22, %v31
    %v33 = vlaneseq
    %v34 = vshrl.u32 %v33, 7
    %v35 = vsub.s32 4, %v34
    %v36 = vrot.slane %v22, %v35
    %v39 = vlaneseq
    %v40 = vshrl.u32 %v39, 7
    %v41 = vsub.s32 0, %v40
    %v42 = vrot.slane %v32, %v41
    %v43 = vlaneseq
    %v44 = vshrl.u32 %v43, 7
    %v45 = vsub.s32 0, %v44
    %v46 = vrot.slane %v36, %v45
    %v47 = vmul.f32 %v26, %v42
    %v48 = vmul.f32 %v26, %v46
    %49 = vset.pattern.permute.xlu0 1
    %50 = vperm.xlu0 %49, %v21
    %v51 = vpop.permute.xlu0 %50
    %v53 = vlaneseq
    %v54 = vshrl.u32 %v53, 7
    %v55 = vsub.s32 1, %v54
    %v56 = vrot.slane %v22, %v55
    %v57 = vlaneseq
    %v58 = vshrl.u32 %v57, 7
    %v59 = vsub.s32 5, %v58
    %v60 = vrot.slane %v22, %v59
    %v63 = vlaneseq
    %v64 = vshrl.u32 %v63, 7
    %v65 = vsub.s32 1, %v64
    %v66 = vrot.slane %v56, %v65
    %v67 = vlaneseq
    %v68 = vshrl.u32 %v67, 7
    %v69 = vsub.s32 1, %v68
    %v70 = vrot.slane %v60, %v69
    %v71 = vmul.f32 %v51, %v66
    %v72 = vmul.f32 %v51, %v70
    %v73 = vadd.f32 %v47, %v71
    %v74 = vadd.f32 %v48, %v72
    %75 = vset.pattern.permute.xlu0 2
    %76 = vperm.xlu0 %75, %v21
    %v77 = vpop.permute.xlu0 %76
    %v79 = vlaneseq
    %v80 = vshrl.u32 %v79, 7
    %v81 = vsub.s32 2, %v80
    %v82 = vrot.slane %v22, %v81
    %v83 = vlaneseq
    %v84 = vshrl.u32 %v83, 7
    %v85 = vsub.s32 6, %v84
    %v86 = vrot.slane %v22, %v85
    %v89 = vlaneseq
    %v90 = vshrl.u32 %v89, 7
    %v91 = vsub.s32 2, %v90
    %v92 = vrot.slane %v82, %v91
    %v93 = vlaneseq
    %v94 = vshrl.u32 %v93, 7
    %v95 = vsub.s32 2, %v94
    %v96 = vrot.slane %v86, %v95
    %v97 = vmul.f32 %v77, %v92
    %v98 = vmul.f32 %v77, %v96
    %v99 = vadd.f32 %v73, %v97
    %v100 = vadd.f32 %v74, %v98
    %v101 = vld [vmem:[%s2] sm:$0x3]
    %v103 = vlaneseq
    %v104 = vshrl.u32 %v103, 7
    %v105 = vsub.s32 0, %v104
    %v106 = vrot.slane %v101, %v105
    %v107 = vlaneseq
    %v108 = vshrl.u32 %v107, 7
    %v109 = vsub.s32 1, %v108
    %v110 = vrot.slane %v101, %v109
    %v113 = vadd.f32 %v99, %v106
    %v114 = vadd.f32 %v100, %v110
    %v115 = vmax.f32 %v113, 0.0
    %v116 = vmax.f32 %v114, 0.0
    %v117 = vld [vmem:[%s3] sm:$0xff]
    %v118 = vld [vmem:[%s3 + $0x8] sm:$0xff]
    %v119 = vld [vmem:[%s3 + $0x10] sm:$0xff]
    %v120 = vld [vmem:[%s3 + $0x18] sm:$0xff]
    %v121 = vld [vmem:[%s3 + $0x20] sm:$0xff]
    %v122 = vld [vmem:[%s3 + $0x28] sm:$0xff]
    %v123 = vld [vmem:[%s3 + $0x30] sm:$0xff]
    %v124 = vld [vmem:[%s3 + $0x38] sm:$0xff]
    %v125 = vld [vmem:[%s3 + $0x40] sm:$0xff]
    %v126 = vld [vmem:[%s3 + $0x48] sm:$0xff]
    %v127 = vld [vmem:[%s3 + $0x50] sm:$0xff]
    %v128 = vld [vmem:[%s3 + $0x58] sm:$0xff]
    %v129 = vld [vmem:[%s3 + $0x60] sm:$0xff]
    %v130 = vld [vmem:[%s3 + $0x68] sm:$0xff]
    %v131 = vld [vmem:[%s3 + $0x70] sm:$0xff]
    %v132 = vld [vmem:[%s3 + $0x78] sm:$0xff]
    %v133 = vld [vmem:[%s3 + $0x80] sm:$0xff]
    %v134 = vld [vmem:[%s3 + $0x88] sm:$0xff]
    %v135 = vld [vmem:[%s3 + $0x90] sm:$0x3f]
    %v136 = vld [vmem:[%s4] sm:$0x1]
    %v138 = vlaneseq
    %v139 = vshrl.u32 %v138, 7
    %v140 = vsub.s32 0, %v139
    %v141 = vrot.slane %v136, %v140
    %vm143 = vcmask 179200
    %v145 = vsel %vm143, %v116, 0
    %vm147 = vcmask 1045504
    %v149 = vsel %vm147, %v135, 0
    %151 = vmatprep.subr.mxu0 0.0
    %152 = vmatpush1.msra.mxu0 %v117
    %153 = vmatprep.subr.mxu0 0.0
    %154 = vmatpush1.msra.mxu0 %v118
    %155 = vmatprep.subr.mxu0 0.0
    %156 = vmatpush1.msra.mxu0 %v119
    %157 = vmatprep.subr.mxu0 0.0
    %158 = vmatpush1.msra.mxu0 %v120
    %159 = vmatprep.subr.mxu0 0.0
    %160 = vmatpush1.msra.mxu0 %v121
    %161 = vmatprep.subr.mxu0 0.0
    %162 = vmatpush1.msra.mxu0 %v122
    %163 = vmatprep.subr.mxu0 0.0
    %164 = vmatpush1.msra.mxu0 %v123
    %165 = vmatprep.subr.mxu0 0.0
    %166 = vmatpush1.msra.mxu0 %v124
    %167 = vmatprep.subr.mxu0 0.0
    %168 = vmatpush1.msra.mxu0 %v125
    %169 = vmatprep.subr.mxu0 0.0
    %170 = vmatpush1.msra.mxu0 %v126
    %171 = vmatprep.subr.mxu0 0.0
    %172 = vmatpush1.msra.mxu0 %v127
    %173 = vmatprep.subr.mxu0 0.0
    %174 = vmatpush1.msra.mxu0 %v128
    %175 = vmatprep.subr.mxu0 0.0
    %176 = vmatpush1.msra.mxu0 %v129
    %177 = vmatprep.subr.mxu0 0.0
    %178 = vmatpush1.msra.mxu0 %v130
    %179 = vmatprep.subr.mxu0 0.0
    %180 = vmatpush1.msra.mxu0 %v131
    %181 = vmatprep.subr.mxu0 0.0
    %182 = vmatpush1.msra.mxu0 %v132
    %183 = vmatprep.subr.mxu0 0.0
    %184 = vmatpush1.msra.mxu0 %v133
    %185 = vmatprep.subr.mxu0 0.0
    %186 = vmatpush1.msra.mxu0 %v134
    %187 = vmatprep.subr.mxu0 0.0
    %188 = vmatpush1.msra.mxu0 %v149
    %189 = vmatprep.subr.mxu0 0.0
    %190 = vmatpush1.msra.mxu0 0.0
    %191 = vmatprep.subr.mxu0 0.0
    %192 = vmatpush1.msra.mxu0 0.0
    %193 = vmatprep.subr.mxu0 0.0
    %194 = vmatpush1.msra.mxu0 0.0
    %195 = vmatprep.subr.mxu0 0.0
    %196 = vmatpush1.msra.mxu0 0.0
    %197 = vmatprep.subr.mxu0 0.0
    %198 = vmatpush1.msra.mxu0 0.0
    %199 = vmatprep.subr.mxu0 0.0
    %200 = vmatpush1.msra.mxu0 0.0
    %201 = vmatprep.subr.mxu0 0.0
    %202 = vmatpush1.msra.mxu0 0.0
    %203 = vmatprep.subr.mxu0 0.0
    %204 = vmatpush1.msra.mxu0 0.0
    %205 = vmatprep.subr.mxu0 0.0
    %206 = vmatpush1.msra.mxu0 0.0
    %207 = vmatprep.subr.mxu0 0.0
    %208 = vmatpush1.msra.mxu0 0.0
    %209 = vmatprep.subr.mxu0 0.0
    %210 = vmatpush1.msra.mxu0 0.0
    %211 = vmatprep.subr.mxu0 0.0
    %212 = vmatpush1.msra.mxu0 0.0
    %213 = vmatprep.subr.mxu0 0.0
    %214 = vmatpush1.msra.mxu0 0.0
    %215 = vmatprep.mubr.f32.mxu0 %v145
    %216 = vmatmul.mubr.f32.gmra.mrb[0].mxu0 %v115
    %v217 = vpop.f32.mrb[0].mxu0
    %v218 = vadd.f32 %v141, %v217
    %v219 = vpop.f32.mrb[0].mxu0
    %220 = vdwg.mxu0
    %vm221 = vcmask 39936
    %222 = vst.msk [vmem:[#allocation2] sm:$0xff] %vm221, %v218
    // Predicated region
    $region22: #{simple_net_forward.1} parent=1 // pred_check
      _
    $region23: #{simple_net_forward.1} parent=1 // pred_check_branch
      %224 = sbr.rel (0) target = $region25
    $region24: #{simple_net_forward.1} parent=1 // pred_region
      %s226 = ssub.s32 128, 128
      %227 = vsyncadd [#allocation3], %s226
      %s229 = sshll.u32 [#allocation2], 4
      %s230 = int_to_ptr.vmem [resolvable:$true] %s229
      %232 = dma.vmem_to_hbm [thread:$0]  %s230, 128, %s5, [#allocation3]
    $region25: #{simple_net_forward.1} parent=1 // pred_fallthru
      _
    // Predicated region
    $region26: #{simple_net_forward.1} parent=1 // pred_check
      _
    $region27: #{simple_net_forward.1} parent=1 // pred_check_branch
      %234 = sbr.rel (0) target = $region29
    $region28: #{simple_net_forward.1} parent=1 // pred_region
      %235 = dma.done [#allocation3], 128
    $region29: #{simple_net_forward.1} parent=1 // pred_fallthru
      _
    %236 = vsyncpa [#allocation3], 1

</llo_original>
